<compile_context>
chip_gen: v7x
topology: tpu7x:2x2x1
jax: 0.10.0
libtpu: 0.0.40
codegen_flags: <defaults>
</compile_context>

<pallas_src>
import functools

import numpy as np
import jax
import jax.numpy as jnp
from jax import lax
from jax.experimental import pallas as pl
from jax.experimental.pallas import tpu as pltpu

EPS = 1e-5


# ------------------------------ Pallas kernel ------------------------------ #

def _residual_unit_kernel(x_ref, w1_ref, b1_ref, w2_ref, b2_ref, alpha_ref,
                          out_ref, y1_ref, y2_ref, y1pad_ref, *, H, W, Cout):
    """Fused ResidualUnit forward for one batch element.

    x_ref:    (1, CP, Lpad)  zero-padded (top1/bot2/left1/right1) channel-padded
                             input, rows flattened with stride Wp = W + 2.
    w1_ref:   (2*Cout, 9*CP) subunit-1 conv weights (offset-major im2col layout)
                             stacked with the residual 1x1 conv (center-tap cols).
    b1_ref:   (2*Cout, 1)    [b1 ; b_res]
    w2_ref:   (Cout, 9*Cout) subunit-2 conv weights (offset-major im2col layout)
    b2_ref:   (Cout, 1)
    alpha_ref:(2,) in SMEM   PReLU slopes for subunit 1 / 2.
    outputs:  (1, Cout, D)   D = H * Wp flattened padded-row domain
                             (columns >= W of each row are padding / garbage).
    y1pad_ref:(Cout, Lpad)   VMEM scratch: zero-padded y1 for subunit-2 patches.
    """
    Wp = W + 2
    D = H * Wp
    offsets = [kh * Wp + kw for kh in range(3) for kw in range(3)]

    # Lane-validity mask over the (H, Wp) flat domain: the last 2 columns of
    # each row are padding and must not contribute to InstanceNorm statistics.
    col = lax.broadcasted_iota(jnp.int32, (1, D), 1) % Wp
    valid = col < W                       # (1, D) bool
    maskf = valid.astype(jnp.float32)
    inv_hw = 1.0 / float(H * W)

    def inorm_prelu(c, alpha):
        # One-pass per-channel stats over the spatial (lane) axis.
        cm = c * maskf
        s1 = jnp.sum(cm, axis=1, keepdims=True)
        s2 = jnp.sum(cm * c, axis=1, keepdims=True)
        mean = s1 * inv_hw
        var = jnp.maximum(s2 * inv_hw - mean * mean, 0.0)
        yn = (c - mean) * lax.rsqrt(var + EPS)
        return jnp.where(yn >= 0, yn, alpha * yn)

    # ---- subunit 1 (3x3 conv) fused with the residual 1x1 conv -------------
    # Patch matrix: nine shifted windows (plain static-offset VMEM loads),
    # concatenated along the contraction axis -> (9*CP, D).
    p1 = jnp.concatenate([x_ref[0, :, pl.ds(s, D)] for s in offsets], axis=0)
    pre1 = jnp.dot(w1_ref[...], p1,
                   preferred_element_type=jnp.float32) + b1_ref[...]
    conv1 = pre1[:Cout, :]                # 3x3 conv of subunit 1
    res = pre1[Cout:, :]                  # residual 1x1 conv (+ its bias)
    y1 = inorm_prelu(conv1, alpha_ref[0])
    # Zero the padding columns so the staged buffer acts as conv zero-padding.
    y1z = jnp.where(valid, y1, 0.0)

    # Stage y1 into a zero-padded scratch so subunit-2 patches are again plain
    # offset loads (keeps y1 entirely in VMEM, no HBM round trip).
    y1pad_ref[...] = jnp.zeros_like(y1pad_ref)
    y1pad_ref[:, pl.ds(Wp + 1, D)] = y1z

    # ---- subunit 2 (3x3 conv -> IN -> PReLU) --------------------------------
    p2 = jnp.concatenate([y1pad_ref[:, pl.ds(s, D)] for s in offsets], axis=0)
    conv2 = jnp.dot(w2_ref[...], p2,
                    preferred_element_type=jnp.float32) + b2_ref[...]
    y2 = inorm_prelu(conv2, alpha_ref[1])

    y1_ref[0] = y1z
    y2_ref[0] = y2
    out_ref[0] = y2 + res


# ------------------------------ JAX wrapper --------------------------------- #

def residual_unit_pallas(x, w1, b1, a1, w2, b2, a2, wr, br, ratio=1.0):
    """Forward of ResidualUnit.  x: (N, Cin, H, W) NCHW.

    Returns (output (N, Cout, H, W), output_list (kept_subunits, N, Cout, H, W)).
    """
    N, Cin, H, W = x.shape
    Cout = w1.shape[0]
    Wp = W + 2
    D = H * Wp                      # flattened padded-row compute domain
    Lpad = (H + 3) * Wp             # pad: top=1, bottom=2, left=1, right=1
    CP = ((Cin + 7) // 8) * 8       # channel-pad Cin to a sublane multiple

    # --- zero-padded, channel-padded, row-flattened input (N, CP, Lpad) ------
    xp = jnp.pad(x.astype(jnp.float32), ((0, 0), (0, 0), (1, 2), (1, 1)))
    xp = jnp.pad(xp, ((0, 0), (0, CP - Cin), (0, 0), (0, 0)))
    xp = xp.reshape(N, CP, Lpad)

    # --- weights in offset-major im2col layout; residual 1x1 folded in -------
    w1p = jnp.pad(w1.astype(jnp.float32), ((0, 0), (0, CP - Cin), (0, 0), (0, 0)))
    w1m = jnp.transpose(w1p, (0, 2, 3, 1)).reshape(Cout, 9 * CP)
    wrp = jnp.pad(wr.reshape(Cout, Cin).astype(jnp.float32),
                  ((0, 0), (0, CP - Cin)))
    wr_aug = jnp.zeros((Cout, 9 * CP), jnp.float32)
    wr_aug = wr_aug.at[:, 4 * CP:5 * CP].set(wrp)        # center tap (kh=kw=1)
    w1_aug = jnp.concatenate([w1m, wr_aug], axis=0)      # (2*Cout, 9*CP)
    b1_aug = jnp.concatenate([b1, br]).astype(jnp.float32).reshape(2 * Cout, 1)

    w2m = jnp.transpose(w2.astype(jnp.float32), (0, 2, 3, 1)).reshape(Cout, 9 * Cout)
    b2v = b2.astype(jnp.float32).reshape(Cout, 1)

    alphas = jnp.stack([jnp.asarray(a1, jnp.float32).reshape(()),
                        jnp.asarray(a2, jnp.float32).reshape(())])

    kernel = functools.partial(_residual_unit_kernel, H=H, W=W, Cout=Cout)
    out, y1, y2 = pl.pallas_call(
        kernel,
        out_shape=(jax.ShapeDtypeStruct((N, Cout, D), jnp.float32),
                   jax.ShapeDtypeStruct((N, Cout, D), jnp.float32),
                   jax.ShapeDtypeStruct((N, Cout, D), jnp.float32)),
        grid_spec=pltpu.PrefetchScalarGridSpec(
            num_scalar_prefetch=0,
            grid=(N,),
            in_specs=[
                pl.BlockSpec((1, CP, Lpad), lambda n: (n, 0, 0)),
                pl.BlockSpec((2 * Cout, 9 * CP), lambda n: (0, 0)),
                pl.BlockSpec((2 * Cout, 1), lambda n: (0, 0)),
                pl.BlockSpec((Cout, 9 * Cout), lambda n: (0, 0)),
                pl.BlockSpec((Cout, 1), lambda n: (0, 0)),
                pl.BlockSpec(memory_space=pltpu.MemorySpace.SMEM),
            ],
            out_specs=[
                pl.BlockSpec((1, Cout, D), lambda n: (n, 0, 0)),
                pl.BlockSpec((1, Cout, D), lambda n: (n, 0, 0)),
                pl.BlockSpec((1, Cout, D), lambda n: (n, 0, 0)),
            ],
            scratch_shapes=[pltpu.VMEM((Cout, Lpad), jnp.float32)],
        ),
        compiler_params=pltpu.CompilerParams(
            dimension_semantics=("parallel",)),
    )(xp, w1_aug, b1_aug, w2m, b2v, alphas)

    def to_nchw(a):
        # Drop the two padding columns of every row; reshape is free (no transpose).
        return a.reshape(N, Cout, H, Wp)[..., :W]

    out_nchw = to_nchw(out)
    y1_nchw = to_nchw(y1)
    y2_nchw = to_nchw(y2)

    # pad_tensor_list_equal(..., combine=2): at stride 1 all subunit outputs
    # already share a shape, so this reduces to a stack along a new leading dim.
    # TODO(synk): `pad_tensor_list_equal` is not defined in the reference source;
    # implemented as stack (no padding needed at stride 1).
    output_list = jnp.stack([y1_nchw, y2_nchw], axis=0)
    keep_len = int(round(output_list.shape[0] * ratio))
    # Mirrors the PyTorch slicing exactly (including the ratio<=0 edge case).
    output_list = output_list[:keep_len] if ratio > 0 else output_list[-keep_len:]
    return out_nchw, output_list


# -------------------------------- reference --------------------------------- #

def residual_unit_ref(x, w1, b1, a1, w2, b2, a2, wr, br):
    def conv(x, w, b, pad):
        y = lax.conv_general_dilated(
            x, w, (1, 1), [(pad, pad), (pad, pad)],
            dimension_numbers=("NCHW", "OIHW", "NCHW"))
        return y + b[None, :, None, None]

    def inorm(x):
        m = x.mean(axis=(2, 3), keepdims=True)
        v = ((x - m) ** 2).mean(axis=(2, 3), keepdims=True)
        return (x - m) * lax.rsqrt(v + EPS)

    def prelu(x, a):
        return jnp.where(x >= 0, x, a * x)

    res = conv(x, wr, br, 0)
    y1 = prelu(inorm(conv(x, w1, b1, 1)), a1)
    y2 = prelu(inorm(conv(y1, w2, b2, 1)), a2)
    return y2 + res, jnp.stack([y1, y2], axis=0)


# ----------------------------------- main ------------------------------------ #

if __name__ == "__main__":
    N, Cin, Cout, H, W = 2, 4, 8, 16, 16

    key = jax.random.PRNGKey(0)
    k = jax.random.split(key, 7)
    x = jax.random.normal(k[0], (N, Cin, H, W), jnp.float32)

    # Deterministic synthetic parameters (shapes from the module's __init__).
    w1 = 0.1 * jax.random.normal(k[1], (Cout, Cin, 3, 3), jnp.float32)
    b1 = 0.1 * jax.random.normal(k[2], (Cout,), jnp.float32)
    w2 = 0.1 * jax.random.normal(k[3], (Cout, Cout, 3, 3), jnp.float32)
    b2 = 0.1 * jax.random.normal(k[4], (Cout,), jnp.float32)
    wr = 0.1 * jax.random.normal(k[5], (Cout, Cin, 1, 1), jnp.float32)
    br = 0.1 * jax.random.normal(k[6], (Cout,), jnp.float32)
    a1 = jnp.array(0.25, jnp.float32)   # PReLU default init (shared slope)
    a2 = jnp.array(0.25, jnp.float32)

    out, out_list = jax.jit(residual_unit_pallas)(x, w1, b1, a1, w2, b2, a2, wr, br)
    jax.block_until_ready((out, out_list))

    ref_out, ref_list = residual_unit_ref(x, w1, b1, a1, w2, b2, a2, wr, br)
    np.testing.assert_allclose(np.asarray(out), np.asarray(ref_out),
                               rtol=1e-3, atol=1e-3)
    np.testing.assert_allclose(np.asarray(out_list), np.asarray(ref_list),
                               rtol=1e-3, atol=1e-3)

    print("KERNEL_OK")
</pallas_src>

<mosaic_0001>
module attributes {stable_mosaic.version = 11 : i64} {
  func.func @_residual_unit_kernel(%arg0: i32, %arg1: memref<1x8x342xf32, #tpu.memory_space<vmem>>, %arg2: memref<16x72xf32, #tpu.memory_space<vmem>>, %arg3: memref<16x1xf32, #tpu.memory_space<vmem>>, %arg4: memref<8x72xf32, #tpu.memory_space<vmem>>, %arg5: memref<8x1xf32, #tpu.memory_space<vmem>>, %arg6: memref<2xf32, #tpu.memory_space<smem>>, %arg7: memref<1x8x288xf32, #tpu.memory_space<vmem>>, %arg8: memref<1x8x288xf32, #tpu.memory_space<vmem>>, %arg9: memref<1x8x288xf32, #tpu.memory_space<vmem>>, %arg10: memref<8x342xf32, #tpu.memory_space<vmem>>) attributes {dimension_semantics = [#tpu.dimension_semantics<parallel>], iteration_bounds = array<i64: 2>, scalar_prefetch = 0 : i64, scratch_operands = 1 : i64, tpu.core_type = #tpu.core_type<tc>, window_params = [{transform_indices = @transform_0, window_bounds = array<i64: 1, 8, 342>}, {pipeline_mode = #tpu.pipeline_mode<synchronous>, transform_indices = @transform_1, window_bounds = array<i64: 16, 72>}, {pipeline_mode = #tpu.pipeline_mode<synchronous>, transform_indices = @transform_2, window_bounds = array<i64: 16, 1>}, {pipeline_mode = #tpu.pipeline_mode<synchronous>, transform_indices = @transform_3, window_bounds = array<i64: 8, 72>}, {pipeline_mode = #tpu.pipeline_mode<synchronous>, transform_indices = @transform_4, window_bounds = array<i64: 8, 1>}, {transform_indices = @transform_5, window_bounds = array<i64: 2>}, {transform_indices = @transform_6, window_bounds = array<i64: 1, 8, 288>}, {transform_indices = @transform_7, window_bounds = array<i64: 1, 8, 288>}, {transform_indices = @transform_8, window_bounds = array<i64: 1, 8, 288>}]} {
    %0 = tpu.iota {dimensions = array<i32: 1>} : vector<1x288xi32>
    %c18_i32 = arith.constant 18 : i32
    %c0_i32 = arith.constant 0 : i32
    %1 = arith.cmpi eq, %c18_i32, %c0_i32 : i32
    %c1_i32 = arith.constant 1 : i32
    %2 = arith.select %1, %c1_i32, %c18_i32 : i32
    %3 = vector.broadcast %2 : i32 to vector<1x288xi32>
    %4 = arith.remsi %0, %3 : vector<1x288xi32>
    %c0_i32_0 = arith.constant 0 : i32
    %5 = vector.broadcast %c0_i32_0 : i32 to vector<1x288xi32>
    %6 = arith.cmpi ne, %4, %5 : vector<1x288xi32>
    %c0_i32_1 = arith.constant 0 : i32
    %7 = vector.broadcast %c0_i32_1 : i32 to vector<1x288xi32>
    %8 = arith.cmpi slt, %4, %7 : vector<1x288xi32>
    %c0_i32_2 = arith.constant 0 : i32
    %9 = arith.cmpi slt, %2, %c0_i32_2 : i32
    %10 = vector.broadcast %9 : i1 to vector<1x288xi1>
    %11 = vector.broadcast %10 : vector<1x288xi1> to vector<1x288xi1>
    %12 = arith.xori %8, %11 : vector<1x288xi1>
    %13 = arith.andi %12, %6 : vector<1x288xi1>
    %14 = vector.broadcast %2 : i32 to vector<1x288xi32>
    %15 = arith.addi %4, %14 : vector<1x288xi32>
    %16 = arith.select %13, %15, %4 : vector<1x288xi1>, vector<1x288xi32>
    %c16_i32 = arith.constant 16 : i32
    %17 = vector.broadcast %c16_i32 : i32 to vector<1x288xi32>
    %18 = arith.cmpi slt, %16, %17 : vector<1x288xi32>
    %19 = arith.extui %18 : vector<1x288xi1> to vector<1x288xi32>
    %20 = arith.sitofp %19 : vector<1x288xi32> to vector<1x288xf32>
    %c0 = arith.constant 0 : index
    %c0_3 = arith.constant 0 : index
    %c0_4 = arith.constant 0 : index
    %21 = vector.load %arg1[%c0, %c0_3, %c0_4] : memref<1x8x342xf32, #tpu.memory_space<vmem>>, vector<1x8x288xf32>
    %22 = vector.shape_cast %21 : vector<1x8x288xf32> to vector<8x288xf32>
    %c0_5 = arith.constant 0 : index
    %c0_6 = arith.constant 0 : index
    %c1 = arith.constant 1 : index
    %23 = vector.load %arg1[%c0_5, %c0_6, %c1] : memref<1x8x342xf32, #tpu.memory_space<vmem>>, vector<1x8x288xf32>
    %24 = vector.shape_cast %23 : vector<1x8x288xf32> to vector<8x288xf32>
    %c0_7 = arith.constant 0 : index
    %c0_8 = arith.constant 0 : index
    %c2 = arith.constant 2 : index
    %25 = vector.load %arg1[%c0_7, %c0_8, %c2] : memref<1x8x342xf32, #tpu.memory_space<vmem>>, vector<1x8x288xf32>
    %26 = vector.shape_cast %25 : vector<1x8x288xf32> to vector<8x288xf32>
    %c0_9 = arith.constant 0 : index
    %c0_10 = arith.constant 0 : index
    %c18 = arith.constant 18 : index
    %27 = vector.load %arg1[%c0_9, %c0_10, %c18] : memref<1x8x342xf32, #tpu.memory_space<vmem>>, vector<1x8x288xf32>
    %28 = vector.shape_cast %27 : vector<1x8x288xf32> to vector<8x288xf32>
    %c0_11 = arith.constant 0 : index
    %c0_12 = arith.constant 0 : index
    %c19 = arith.constant 19 : index
    %29 = vector.load %arg1[%c0_11, %c0_12, %c19] : memref<1x8x342xf32, #tpu.memory_space<vmem>>, vector<1x8x288xf32>
    %30 = vector.shape_cast %29 : vector<1x8x288xf32> to vector<8x288xf32>
    %c0_13 = arith.constant 0 : index
    %c0_14 = arith.constant 0 : index
    %c20 = arith.constant 20 : index
    %31 = vector.load %arg1[%c0_13, %c0_14, %c20] : memref<1x8x342xf32, #tpu.memory_space<vmem>>, vector<1x8x288xf32>
    %32 = vector.shape_cast %31 : vector<1x8x288xf32> to vector<8x288xf32>
    %c0_15 = arith.constant 0 : index
    %c0_16 = arith.constant 0 : index
    %c36 = arith.constant 36 : index
    %33 = vector.load %arg1[%c0_15, %c0_16, %c36] : memref<1x8x342xf32, #tpu.memory_space<vmem>>, vector<1x8x288xf32>
    %34 = vector.shape_cast %33 : vector<1x8x288xf32> to vector<8x288xf32>
    %c0_17 = arith.constant 0 : index
    %c0_18 = arith.constant 0 : index
    %c37 = arith.constant 37 : index
    %35 = vector.load %arg1[%c0_17, %c0_18, %c37] : memref<1x8x342xf32, #tpu.memory_space<vmem>>, vector<1x8x288xf32>
    %36 = vector.shape_cast %35 : vector<1x8x288xf32> to vector<8x288xf32>
    %c0_19 = arith.constant 0 : index
    %c0_20 = arith.constant 0 : index
    %c38 = arith.constant 38 : index
    %37 = vector.load %arg1[%c0_19, %c0_20, %c38] : memref<1x8x342xf32, #tpu.memory_space<vmem>>, vector<1x8x288xf32>
    %38 = vector.shape_cast %37 : vector<1x8x288xf32> to vector<8x288xf32>
    %39 = tpu.concatenate %22, %24, %26, %28, %30, %32, %34, %36, %38 in 0 : vector<8x288xf32>, vector<8x288xf32>, vector<8x288xf32>, vector<8x288xf32>, vector<8x288xf32>, vector<8x288xf32>, vector<8x288xf32>, vector<8x288xf32>, vector<8x288xf32> -> vector<72x288xf32>
    %c0_21 = arith.constant 0 : index
    %c0_22 = arith.constant 0 : index
    %40 = vector.load %arg2[%c0_21, %c0_22] : memref<16x72xf32, #tpu.memory_space<vmem>>, vector<16x72xf32>
    %cst = arith.constant dense<0.000000e+00> : vector<16x288xf32>
    %41 = tpu.matmul %40, %39, %cst {dimension_numbers = #tpu.dot_dimension_numbers<[1], [0], [0], [1], [0, 0, 1, 1], [], []>} : vector<16x72xf32>, vector<72x288xf32>, vector<16x288xf32> -> vector<16x288xf32>
    %c0_23 = arith.constant 0 : index
    %c0_24 = arith.constant 0 : index
    %42 = vector.load %arg3[%c0_23, %c0_24] : memref<16x1xf32, #tpu.memory_space<vmem>>, vector<16x1xf32>
    %43 = vector.broadcast %42 : vector<16x1xf32> to vector<16x288xf32>
    %44 = arith.addf %41, %43 : vector<16x288xf32>
    %45 = vector.extract_strided_slice %44 {offsets = [0, 0], sizes = [8, 288], strides = [1, 1]} : vector<16x288xf32> to vector<8x288xf32>
    %46 = vector.extract_strided_slice %44 {offsets = [8, 0], sizes = [8, 288], strides = [1, 1]} : vector<16x288xf32> to vector<8x288xf32>
    %c0_25 = arith.constant 0 : index
    %47 = memref.load %arg6[%c0_25] : memref<2xf32, #tpu.memory_space<smem>>
    %48 = vector.broadcast %20 : vector<1x288xf32> to vector<8x288xf32>
    %49 = arith.mulf %45, %48 : vector<8x288xf32>
    %cst_26 = arith.constant dense<0.000000e+00> : vector<8xf32>
    %50 = vector.multi_reduction <add>, %49, %cst_26 [1] : vector<8x288xf32> to vector<8xf32>
    %51 = vector.shape_cast %50 : vector<8xf32> to vector<8x1xf32>
    %52 = arith.mulf %49, %45 : vector<8x288xf32>
    %cst_27 = arith.constant dense<0.000000e+00> : vector<8xf32>
    %53 = vector.multi_reduction <add>, %52, %cst_27 [1] : vector<8x288xf32> to vector<8xf32>
    %54 = vector.shape_cast %53 : vector<8xf32> to vector<8x1xf32>
    %cst_28 = arith.constant 3.906250e-03 : f32
    %55 = vector.broadcast %cst_28 : f32 to vector<8x1xf32>
    %56 = arith.mulf %51, %55 : vector<8x1xf32>
    %cst_29 = arith.constant 3.906250e-03 : f32
    %57 = vector.broadcast %cst_29 : f32 to vector<8x1xf32>
    %58 = arith.mulf %54, %57 : vector<8x1xf32>
    %59 = arith.mulf %56, %56 : vector<8x1xf32>
    %60 = arith.subf %58, %59 : vector<8x1xf32>
    %cst_30 = arith.constant 0.000000e+00 : f32
    %61 = vector.broadcast %cst_30 : f32 to vector<8x1xf32>
    %62 = arith.maximumf %60, %61 : vector<8x1xf32>
    %63 = vector.broadcast %56 : vector<8x1xf32> to vector<8x288xf32>
    %64 = arith.subf %45, %63 : vector<8x288xf32>
    %cst_31 = arith.constant 9.99999974E-6 : f32
    %65 = vector.broadcast %cst_31 : f32 to vector<8x1xf32>
    %66 = arith.addf %62, %65 : vector<8x1xf32>
    %67 = math.rsqrt %66 : vector<8x1xf32>
    %68 = vector.broadcast %67 : vector<8x1xf32> to vector<8x288xf32>
    %69 = arith.mulf %64, %68 : vector<8x288xf32>
    %cst_32 = arith.constant 0.000000e+00 : f32
    %70 = vector.broadcast %cst_32 : f32 to vector<8x288xf32>
    %71 = arith.cmpf oge, %69, %70 : vector<8x288xf32>
    %72 = vector.broadcast %47 : f32 to vector<8x288xf32>
    %73 = arith.mulf %72, %69 : vector<8x288xf32>
    %74 = arith.select %71, %69, %73 : vector<8x288xi1>, vector<8x288xf32>
    %cst_33 = arith.constant 0.000000e+00 : f32
    %75 = vector.shape_cast %18 : vector<1x288xi1> to vector<1x288xi1>
    %76 = vector.broadcast %75 : vector<1x288xi1> to vector<8x288xi1>
    %77 = vector.broadcast %cst_33 : f32 to vector<8x288xf32>
    %78 = arith.select %76, %74, %77 : vector<8x288xi1>, vector<8x288xf32>
    %cst_34 = arith.constant 0.000000e+00 : f32
    %79 = vector.broadcast %cst_34 : f32 to vector<8x342xf32>
    %c0_35 = arith.constant 0 : index
    %c0_36 = arith.constant 0 : index
    %80 = vector.load %arg10[%c0_35, %c0_36] : memref<8x342xf32, #tpu.memory_space<vmem>>, vector<8x342xf32>
    tpu.vector_store %arg10[%c0_35, %c0_36], %79 {strides = array<i32>} : memref<8x342xf32, #tpu.memory_space<vmem>>, vector<8x342xf32>,
    %c0_37 = arith.constant 0 : index
    %c19_38 = arith.constant 19 : index
    %81 = vector.load %arg10[%c0_37, %c19_38] : memref<8x342xf32, #tpu.memory_space<vmem>>, vector<8x288xf32>
    tpu.vector_store %arg10[%c0_37, %c19_38], %78 {strides = array<i32>} : memref<8x342xf32, #tpu.memory_space<vmem>>, vector<8x288xf32>,
    %c0_39 = arith.constant 0 : index
    %c0_40 = arith.constant 0 : index
    %82 = vector.load %arg10[%c0_39, %c0_40] : memref<8x342xf32, #tpu.memory_space<vmem>>, vector<8x288xf32>
    %c0_41 = arith.constant 0 : index
    %c1_42 = arith.constant 1 : index
    %83 = vector.load %arg10[%c0_41, %c1_42] : memref<8x342xf32, #tpu.memory_space<vmem>>, vector<8x288xf32>
    %c0_43 = arith.constant 0 : index
    %c2_44 = arith.constant 2 : index
    %84 = vector.load %arg10[%c0_43, %c2_44] : memref<8x342xf32, #tpu.memory_space<vmem>>, vector<8x288xf32>
    %c0_45 = arith.constant 0 : index
    %c18_46 = arith.constant 18 : index
    %85 = vector.load %arg10[%c0_45, %c18_46] : memref<8x342xf32, #tpu.memory_space<vmem>>, vector<8x288xf32>
    %c0_47 = arith.constant 0 : index
    %c19_48 = arith.constant 19 : index
    %86 = vector.load %arg10[%c0_47, %c19_48] : memref<8x342xf32, #tpu.memory_space<vmem>>, vector<8x288xf32>
    %c0_49 = arith.constant 0 : index
    %c20_50 = arith.constant 20 : index
    %87 = vector.load %arg10[%c0_49, %c20_50] : memref<8x342xf32, #tpu.memory_space<vmem>>, vector<8x288xf32>
    %c0_51 = arith.constant 0 : index
    %c36_52 = arith.constant 36 : index
    %88 = vector.load %arg10[%c0_51, %c36_52] : memref<8x342xf32, #tpu.memory_space<vmem>>, vector<8x288xf32>
    %c0_53 = arith.constant 0 : index
    %c37_54 = arith.constant 37 : index
    %89 = vector.load %arg10[%c0_53, %c37_54] : memref<8x342xf32, #tpu.memory_space<vmem>>, vector<8x288xf32>
    %c0_55 = arith.constant 0 : index
    %c38_56 = arith.constant 38 : index
    %90 = vector.load %arg10[%c0_55, %c38_56] : memref<8x342xf32, #tpu.memory_space<vmem>>, vector<8x288xf32>
    %91 = tpu.concatenate %82, %83, %84, %85, %86, %87, %88, %89, %90 in 0 : vector<8x288xf32>, vector<8x288xf32>, vector<8x288xf32>, vector<8x288xf32>, vector<8x288xf32>, vector<8x288xf32>, vector<8x288xf32>, vector<8x288xf32>, vector<8x288xf32> -> vector<72x288xf32>
    %c0_57 = arith.constant 0 : index
    %c0_58 = arith.constant 0 : index
    %92 = vector.load %arg4[%c0_57, %c0_58] : memref<8x72xf32, #tpu.memory_space<vmem>>, vector<8x72xf32>
    %cst_59 = arith.constant dense<0.000000e+00> : vector<8x288xf32>
    %93 = tpu.matmul %92, %91, %cst_59 {dimension_numbers = #tpu.dot_dimension_numbers<[1], [0], [0], [1], [0, 0, 1, 1], [], []>} : vector<8x72xf32>, vector<72x288xf32>, vector<8x288xf32> -> vector<8x288xf32>
    %c0_60 = arith.constant 0 : index
    %c0_61 = arith.constant 0 : index
    %94 = vector.load %arg5[%c0_60, %c0_61] : memref<8x1xf32, #tpu.memory_space<vmem>>, vector<8x1xf32>
    %95 = vector.broadcast %94 : vector<8x1xf32> to vector<8x288xf32>
    %96 = arith.addf %93, %95 : vector<8x288xf32>
    %c1_62 = arith.constant 1 : index
    %97 = memref.load %arg6[%c1_62] : memref<2xf32, #tpu.memory_space<smem>>
    %98 = vector.broadcast %20 : vector<1x288xf32> to vector<8x288xf32>
    %99 = arith.mulf %96, %98 : vector<8x288xf32>
    %cst_63 = arith.constant dense<0.000000e+00> : vector<8xf32>
    %100 = vector.multi_reduction <add>, %99, %cst_63 [1] : vector<8x288xf32> to vector<8xf32>
    %101 = vector.shape_cast %100 : vector<8xf32> to vector<8x1xf32>
    %102 = arith.mulf %99, %96 : vector<8x288xf32>
    %cst_64 = arith.constant dense<0.000000e+00> : vector<8xf32>
    %103 = vector.multi_reduction <add>, %102, %cst_64 [1] : vector<8x288xf32> to vector<8xf32>
    %104 = vector.shape_cast %103 : vector<8xf32> to vector<8x1xf32>
    %cst_65 = arith.constant 3.906250e-03 : f32
    %105 = vector.broadcast %cst_65 : f32 to vector<8x1xf32>
    %106 = arith.mulf %101, %105 : vector<8x1xf32>
    %cst_66 = arith.constant 3.906250e-03 : f32
    %107 = vector.broadcast %cst_66 : f32 to vector<8x1xf32>
    %108 = arith.mulf %104, %107 : vector<8x1xf32>
    %109 = arith.mulf %106, %106 : vector<8x1xf32>
    %110 = arith.subf %108, %109 : vector<8x1xf32>
    %cst_67 = arith.constant 0.000000e+00 : f32
    %111 = vector.broadcast %cst_67 : f32 to vector<8x1xf32>
    %112 = arith.maximumf %110, %111 : vector<8x1xf32>
    %113 = vector.broadcast %106 : vector<8x1xf32> to vector<8x288xf32>
    %114 = arith.subf %96, %113 : vector<8x288xf32>
    %cst_68 = arith.constant 9.99999974E-6 : f32
    %115 = vector.broadcast %cst_68 : f32 to vector<8x1xf32>
    %116 = arith.addf %112, %115 : vector<8x1xf32>
    %117 = math.rsqrt %116 : vector<8x1xf32>
    %118 = vector.broadcast %117 : vector<8x1xf32> to vector<8x288xf32>
    %119 = arith.mulf %114, %118 : vector<8x288xf32>
    %cst_69 = arith.constant 0.000000e+00 : f32
    %120 = vector.broadcast %cst_69 : f32 to vector<8x288xf32>
    %121 = arith.cmpf oge, %119, %120 : vector<8x288xf32>
    %122 = vector.broadcast %97 : f32 to vector<8x288xf32>
    %123 = arith.mulf %122, %119 : vector<8x288xf32>
    %124 = arith.select %121, %119, %123 : vector<8x288xi1>, vector<8x288xf32>
    %c0_70 = arith.constant 0 : index
    %c0_71 = arith.constant 0 : index
    %c0_72 = arith.constant 0 : index
    %125 = vector.load %arg8[%c0_70, %c0_71, %c0_72] : memref<1x8x288xf32, #tpu.memory_space<vmem>>, vector<1x8x288xf32>
    %126 = vector.shape_cast %125 : vector<1x8x288xf32> to vector<8x288xf32>
    %127 = vector.shape_cast %78 : vector<8x288xf32> to vector<1x8x288xf32>
    tpu.vector_store %arg8[%c0_70, %c0_71, %c0_72], %127 {strides = array<i32>} : memref<1x8x288xf32, #tpu.memory_space<vmem>>, vector<1x8x288xf32>,
    %c0_73 = arith.constant 0 : index
    %c0_74 = arith.constant 0 : index
    %c0_75 = arith.constant 0 : index
    %128 = vector.load %arg9[%c0_73, %c0_74, %c0_75] : memref<1x8x288xf32, #tpu.memory_space<vmem>>, vector<1x8x288xf32>
    %129 = vector.shape_cast %128 : vector<1x8x288xf32> to vector<8x288xf32>
    %130 = vector.shape_cast %124 : vector<8x288xf32> to vector<1x8x288xf32>
    tpu.vector_store %arg9[%c0_73, %c0_74, %c0_75], %130 {strides = array<i32>} : memref<1x8x288xf32, #tpu.memory_space<vmem>>, vector<1x8x288xf32>,
    %131 = arith.addf %124, %46 : vector<8x288xf32>
    %c0_76 = arith.constant 0 : index
    %c0_77 = arith.constant 0 : index
    %c0_78 = arith.constant 0 : index
    %132 = vector.load %arg7[%c0_76, %c0_77, %c0_78] : memref<1x8x288xf32, #tpu.memory_space<vmem>>, vector<1x8x288xf32>
    %133 = vector.shape_cast %132 : vector<1x8x288xf32> to vector<8x288xf32>
    %134 = vector.shape_cast %131 : vector<8x288xf32> to vector<1x8x288xf32>
    tpu.vector_store %arg7[%c0_76, %c0_77, %c0_78], %134 {strides = array<i32>} : memref<1x8x288xf32, #tpu.memory_space<vmem>>, vector<1x8x288xf32>,
    return
  }
  func.func @transform_0(%arg0: i32) -> (i32, i32, i32) {
    %c0_i32 = arith.constant 0 : i32
    %c0_i32_0 = arith.constant 0 : i32
    %c0_i32_1 = arith.constant 0 : i32
    return %arg0, %c0_i32, %c0_i32_0 : i32, i32, i32
  }
  func.func @transform_1(%arg0: i32) -> (i32, i32) {
    %c0_i32 = arith.constant 0 : i32
    %c0_i32_0 = arith.constant 0 : i32
    %c0_i32_1 = arith.constant 0 : i32
    return %c0_i32, %c0_i32_0 : i32, i32
  }
  func.func @transform_2(%arg0: i32) -> (i32, i32) {
    %c0_i32 = arith.constant 0 : i32
    %c0_i32_0 = arith.constant 0 : i32
    %c0_i32_1 = arith.constant 0 : i32
    return %c0_i32, %c0_i32_0 : i32, i32
  }
  func.func @transform_3(%arg0: i32) -> (i32, i32) {
    %c0_i32 = arith.constant 0 : i32
    %c0_i32_0 = arith.constant 0 : i32
    %c0_i32_1 = arith.constant 0 : i32
    return %c0_i32, %c0_i32_0 : i32, i32
  }
  func.func @transform_4(%arg0: i32) -> (i32, i32) {
    %c0_i32 = arith.constant 0 : i32
    %c0_i32_0 = arith.constant 0 : i32
    %c0_i32_1 = arith.constant 0 : i32
    return %c0_i32, %c0_i32_0 : i32, i32
  }
  func.func @transform_5(%arg0: i32) -> i32 {
    %c0_i32 = arith.constant 0 : i32
    %c0_i32_0 = arith.constant 0 : i32
    return %c0_i32 : i32
  }
  func.func @transform_6(%arg0: i32) -> (i32, i32, i32) {
    %c0_i32 = arith.constant 0 : i32
    %c0_i32_0 = arith.constant 0 : i32
    %c0_i32_1 = arith.constant 0 : i32
    return %arg0, %c0_i32, %c0_i32_0 : i32, i32, i32
  }
  func.func @transform_7(%arg0: i32) -> (i32, i32, i32) {
    %c0_i32 = arith.constant 0 : i32
    %c0_i32_0 = arith.constant 0 : i32
    %c0_i32_1 = arith.constant 0 : i32
    return %arg0, %c0_i32, %c0_i32_0 : i32, i32, i32
  }
  func.func @transform_8(%arg0: i32) -> (i32, i32, i32) {
    %c0_i32 = arith.constant 0 : i32
    %c0_i32_0 = arith.constant 0 : i32
    %c0_i32_1 = arith.constant 0 : i32
    return %arg0, %c0_i32, %c0_i32_0 : i32, i32, i32
  }
}

</mosaic_0001>

<llo_original>
// kernel: residual_unit_pallas.1
$region0: #{residual_unit_pallas.1}
  #allocation0 [shape = 'u32[]', space=smem, size = 0x4, offset = 0x4, fixed_abs, tag = 'smem constant byte address 0x4 - core index']
  #allocation1 [shape = 'u32[144,128]{1,0:T(1,128)}', space=vmem, size = 0x12000, scoped, tag = 'internal scratch']
  #allocation2 [shape = 'f32[8,342]{1,0:T(8,128)}', space=vmem, size = 0x3000, scoped, tag = 'scratch operand']
  %s0 = inlined_call_operand.vmem [shape: f32[2,8,342], index: 0, kind: input, shape index: {}]
  %s1 = inlined_call_operand.vmem [shape: f32[16,72], index: 1, kind: input, shape index: {}]
  %s2 = inlined_call_operand.vmem [shape: f32[16,1], index: 2, kind: input, shape index: {}]
  %s3 = inlined_call_operand.vmem [shape: f32[8,72], index: 3, kind: input, shape index: {}]
  %s4 = inlined_call_operand.vmem [shape: f32[8,1], index: 4, kind: input, shape index: {}]
  %s5 = inlined_call_operand.vmem [shape: f32[2], index: 5, kind: input, shape index: {}]
  %s6 = inlined_call_operand.vmem [shape: f32[2,8,288], index: 6, kind: output, shape index: {0}]
  %s7 = inlined_call_operand.vmem [shape: f32[2,8,288], index: 7, kind: output, shape index: {1}]
  %s8 = inlined_call_operand.vmem [shape: f32[2,8,288], index: 8, kind: output, shape index: {2}]
  %9 = xla_tuple %s6, %s7, %s8
  %s10 = sld [smem:[#allocation0]]
  $region77: #{residual_unit_pallas.1} parent=0
    _
  %s12 = ssub.s32 1, %s10
  %s13 = scalar_select 0, %s12, %s10
  $region1: #{residual_unit_pallas.1} parent=0
    #allocation3 [shape = 'u8[512]{0}', space=smem, size = 0x200, scoped, tag = 'input window, operand 5, single buffered']
    #allocation4 [shape = 's32[2]{0}', space=sflag, size = 0x8, scoped, tag = 'scoped memory for residual_unit_pallas.1']
    %14 = vsyncpa [#allocation4], 0
    loop: start=0, step=1, limit=4
    $region2: #{residual_unit_pallas.1} parent=1 // loop_pre_header
      _
    $region3: #{residual_unit_pallas.1} parent=1 // loop_header
      %s16 = sphi 0, %s20
      %p17 = scmp.ge.s32.totalorder %s16, 4
      %s26 = sphi 0, %s28
      %s29 = sphi 0, %s26
      %s30 = sphi 0, %s29
      %s46 = sphi 0, %s30
      %s50 = sphi 0, %s50
      %s52 = sphi 0, %s50
      %s53 = sphi 0, %s52
      %s67 = sphi 0, %s53
      %s71 = sphi 0, %s71
      %s73 = sphi 0, %s71
      %s74 = sphi 0, %s73
      %s88 = sphi 0, %s74
      %s92 = sphi 0, %s92
      %s94 = sphi 0, %s92
      %s95 = sphi 0, %s94
      %s109 = sphi 0, %s95
      %s113 = sphi 0, %s113
      %s115 = sphi 0, %s113
      %s116 = sphi 0, %s115
      %s130 = sphi 0, %s116
      %s134 = sphi 0, %s134
      %s136 = sphi 0, %s134
      %s137 = sphi 0, %s136
      %s151 = sphi 0, %s137
      %s157 = sphi 0, %s159
      %s160 = sphi 0, %s157
      %s161 = sphi 0, %s160
      %s177 = sphi 0, %s161
      %s183 = sphi 0, %s185
      %s186 = sphi 0, %s183
      %s187 = sphi 0, %s186
      %s203 = sphi 0, %s187
      %s209 = sphi 0, %s211
      %s212 = sphi 0, %s209
      %s213 = sphi 0, %s212
      %s229 = sphi 0, %s213
    $region4: #{residual_unit_pallas.1} parent=1 // loop_header_branch
      %19 = sbr.rel (%p17) target = $region8
    $region5: #{residual_unit_pallas.1} parent=1 // loop_body
      %s21 = ssub.s32 %s16, 1
      %s22 = ssub.s32 %s16, 2
      %s23 = sadd.s32 %s16, 1
      %s24 = ssub.s32 %s16, %s23
      %p25 = scmp.eq.s32.totalorder %s24, 0
      %s27 = sadd.s32 %s26, 1
      %s28 = scalar_select %p25, %s26, %s27
      %p31 = pneg %p25
      %p32 = scmp.eq.s32.totalorder %s16, 1
      %p33 = por %p31, %p32
      %p34 = scmp.ne.s32.totalorder %s26, %s29
      %p35 = scmp.eq.s32.totalorder %s16, 0
      %p36 = por %p34, %p35
      %p37 = scmp.ne.s32.totalorder %s26, %s29
      %p38 = scmp.eq.s32.totalorder %s21, 1
      %p39 = por %p37, %p38
      %p40 = scmp.ne.s32.totalorder %s29, %s30
      %p41 = scmp.eq.s32.totalorder %s21, 0
      %p42 = por %p40, %p41
      %p43 = scmp.ne.s32.totalorder %s29, %s30
      %p44 = scmp.eq.s32.totalorder %s22, 1
      %p45 = por %p43, %p44
      %p47 = scmp.ne.s32.totalorder %s30, %s46
      %p48 = scmp.eq.s32.totalorder %s22, 0
      %p49 = por %p47, %p48
      %s51 = sadd.s32 %s50, 1
      %p54 = scmp.eq.s32.totalorder %s16, 1
      %p55 = scmp.ne.s32.totalorder %s50, %s52
      %p56 = scmp.eq.s32.totalorder %s16, 0
      %p57 = por %p55, %p56
      %p58 = scmp.ne.s32.totalorder %s50, %s52
      %p59 = scmp.eq.s32.totalorder %s21, 1
      %p60 = por %p58, %p59
      %p61 = scmp.ne.s32.totalorder %s52, %s53
      %p62 = scmp.eq.s32.totalorder %s21, 0
      %p63 = por %p61, %p62
      %p64 = scmp.ne.s32.totalorder %s52, %s53
      %p65 = scmp.eq.s32.totalorder %s22, 1
      %p66 = por %p64, %p65
      %p68 = scmp.ne.s32.totalorder %s53, %s67
      %p69 = scmp.eq.s32.totalorder %s22, 0
      %p70 = por %p68, %p69
      %s72 = sadd.s32 %s71, 1
      %p75 = scmp.eq.s32.totalorder %s16, 1
      %p76 = scmp.ne.s32.totalorder %s71, %s73
      %p77 = scmp.eq.s32.totalorder %s16, 0
      %p78 = por %p76, %p77
      %p79 = scmp.ne.s32.totalorder %s71, %s73
      %p80 = scmp.eq.s32.totalorder %s21, 1
      %p81 = por %p79, %p80
      %p82 = scmp.ne.s32.totalorder %s73, %s74
      %p83 = scmp.eq.s32.totalorder %s21, 0
      %p84 = por %p82, %p83
      %p85 = scmp.ne.s32.totalorder %s73, %s74
      %p86 = scmp.eq.s32.totalorder %s22, 1
      %p87 = por %p85, %p86
      %p89 = scmp.ne.s32.totalorder %s74, %s88
      %p90 = scmp.eq.s32.totalorder %s22, 0
      %p91 = por %p89, %p90
      %s93 = sadd.s32 %s92, 1
      %p96 = scmp.eq.s32.totalorder %s16, 1
      %p97 = scmp.ne.s32.totalorder %s92, %s94
      %p98 = scmp.eq.s32.totalorder %s16, 0
      %p99 = por %p97, %p98
      %p100 = scmp.ne.s32.totalorder %s92, %s94
      %p101 = scmp.eq.s32.totalorder %s21, 1
      %p102 = por %p100, %p101
      %p103 = scmp.ne.s32.totalorder %s94, %s95
      %p104 = scmp.eq.s32.totalorder %s21, 0
      %p105 = por %p103, %p104
      %p106 = scmp.ne.s32.totalorder %s94, %s95
      %p107 = scmp.eq.s32.totalorder %s22, 1
      %p108 = por %p106, %p107
      %p110 = scmp.ne.s32.totalorder %s95, %s109
      %p111 = scmp.eq.s32.totalorder %s22, 0
      %p112 = por %p110, %p111
      %s114 = sadd.s32 %s113, 1
      %p117 = scmp.eq.s32.totalorder %s16, 1
      %p118 = scmp.ne.s32.totalorder %s113, %s115
      %p119 = scmp.eq.s32.totalorder %s16, 0
      %p120 = por %p118, %p119
      %p121 = scmp.ne.s32.totalorder %s113, %s115
      %p122 = scmp.eq.s32.totalorder %s21, 1
      %p123 = por %p121, %p122
      %p124 = scmp.ne.s32.totalorder %s115, %s116
      %p125 = scmp.eq.s32.totalorder %s21, 0
      %p126 = por %p124, %p125
      %p127 = scmp.ne.s32.totalorder %s115, %s116
      %p128 = scmp.eq.s32.totalorder %s22, 1
      %p129 = por %p127, %p128
      %p131 = scmp.ne.s32.totalorder %s116, %s130
      %p132 = scmp.eq.s32.totalorder %s22, 0
      %p133 = por %p131, %p132
      %s135 = sadd.s32 %s134, 1
      %p138 = scmp.eq.s32.totalorder %s16, 1
      %p139 = scmp.ne.s32.totalorder %s134, %s136
      %p140 = scmp.eq.s32.totalorder %s16, 0
      %p141 = por %p139, %p140
      %p142 = scmp.ne.s32.totalorder %s134, %s136
      %p143 = scmp.eq.s32.totalorder %s21, 1
      %p144 = por %p142, %p143
      %p145 = scmp.ne.s32.totalorder %s136, %s137
      %p146 = scmp.eq.s32.totalorder %s21, 0
      %p147 = por %p145, %p146
      %p148 = scmp.ne.s32.totalorder %s136, %s137
      %p149 = scmp.eq.s32.totalorder %s22, 1
      %p150 = por %p148, %p149
      %p152 = scmp.ne.s32.totalorder %s137, %s151
      %p153 = scmp.eq.s32.totalorder %s22, 0
      %p154 = por %p152, %p153
      %s155 = ssub.s32 %s16, %s23
      %p156 = scmp.eq.s32.totalorder %s155, 0
      %s158 = sadd.s32 %s157, 1
      %s159 = scalar_select %p156, %s157, %s158
      %p162 = pneg %p156
      %p163 = scmp.eq.s32.totalorder %s16, 1
      %p164 = por %p162, %p163
      %p165 = scmp.ne.s32.totalorder %s157, %s160
      %p166 = scmp.eq.s32.totalorder %s16, 0
      %p167 = por %p165, %p166
      %p168 = scmp.ne.s32.totalorder %s157, %s160
      %p169 = scmp.eq.s32.totalorder %s21, 1
      %p170 = por %p168, %p169
      %p171 = scmp.ne.s32.totalorder %s160, %s161
      %p172 = scmp.eq.s32.totalorder %s21, 0
      %p173 = por %p171, %p172
      %p174 = scmp.ne.s32.totalorder %s160, %s161
      %p175 = scmp.eq.s32.totalorder %s22, 1
      %p176 = por %p174, %p175
      %p178 = scmp.ne.s32.totalorder %s161, %s177
      %p179 = scmp.eq.s32.totalorder %s22, 0
      %p180 = por %p178, %p179
      %s181 = ssub.s32 %s16, %s23
      %p182 = scmp.eq.s32.totalorder %s181, 0
      %s184 = sadd.s32 %s183, 1
      %s185 = scalar_select %p182, %s183, %s184
      %p188 = pneg %p182
      %p189 = scmp.eq.s32.totalorder %s16, 1
      %p190 = por %p188, %p189
      %p191 = scmp.ne.s32.totalorder %s183, %s186
      %p192 = scmp.eq.s32.totalorder %s16, 0
      %p193 = por %p191, %p192
      %p194 = scmp.ne.s32.totalorder %s183, %s186
      %p195 = scmp.eq.s32.totalorder %s21, 1
      %p196 = por %p194, %p195
      %p197 = scmp.ne.s32.totalorder %s186, %s187
      %p198 = scmp.eq.s32.totalorder %s21, 0
      %p199 = por %p197, %p198
      %p200 = scmp.ne.s32.totalorder %s186, %s187
      %p201 = scmp.eq.s32.totalorder %s22, 1
      %p202 = por %p200, %p201
      %p204 = scmp.ne.s32.totalorder %s187, %s203
      %p205 = scmp.eq.s32.totalorder %s22, 0
      %p206 = por %p204, %p205
      %s207 = ssub.s32 %s16, %s23
      %p208 = scmp.eq.s32.totalorder %s207, 0
      %s210 = sadd.s32 %s209, 1
      %s211 = scalar_select %p208, %s209, %s210
      %p214 = pneg %p208
      %p215 = scmp.eq.s32.totalorder %s16, 1
      %p216 = por %p214, %p215
      %p217 = scmp.ne.s32.totalorder %s209, %s212
      %p218 = scmp.eq.s32.totalorder %s16, 0
      %p219 = por %p217, %p218
      %p220 = scmp.ne.s32.totalorder %s209, %s212
      %p221 = scmp.eq.s32.totalorder %s21, 1
      %p222 = por %p220, %p221
      %p223 = scmp.ne.s32.totalorder %s212, %s213
      %p224 = scmp.eq.s32.totalorder %s21, 0
      %p225 = por %p223, %p224
      %p226 = scmp.ne.s32.totalorder %s212, %s213
      %p227 = scmp.eq.s32.totalorder %s22, 1
      %p228 = por %p226, %p227
      %p230 = scmp.ne.s32.totalorder %s213, %s229
      %p231 = scmp.eq.s32.totalorder %s22, 0
      %p232 = por %p230, %p231
      %p233 = scmp.le.s32.totalorder 1, %s16
      %p234 = scmp.lt.s32.totalorder %s16, 3
      %p235 = pnand %p233, %p234
      %p236 = pneg %p235
      // Predicated region
      $region9: #{residual_unit_pallas.1} parent=5 // pred_check
        _
      $region10: #{residual_unit_pallas.1} parent=5 // pred_check_branch
        %238 = sbr.rel (%p235) target = $region12
      $region11: #{residual_unit_pallas.1} parent=5 // pred_region
        %s239 = ssub.s32 %s16, 1
        // Predicated region
        $region13: #{residual_unit_pallas.1} parent=11 // pred_check
          %p240 = pneg %p63
        $region14: #{residual_unit_pallas.1} parent=11 // pred_check_branch
          %242 = sbr.rel (%p240) target = $region16
        $region15: #{residual_unit_pallas.1} parent=11 // pred_region
          _
        $region16: #{residual_unit_pallas.1} parent=11 // pred_fallthru
          _
        // Predicated region
        $region17: #{residual_unit_pallas.1} parent=11 // pred_check
          %p243 = pneg %p84
        $region18: #{residual_unit_pallas.1} parent=11 // pred_check_branch
          %245 = sbr.rel (%p243) target = $region20
        $region19: #{residual_unit_pallas.1} parent=11 // pred_region
          _
        $region20: #{residual_unit_pallas.1} parent=11 // pred_fallthru
          _
        // Predicated region
        $region21: #{residual_unit_pallas.1} parent=11 // pred_check
          %p246 = pneg %p105
        $region22: #{residual_unit_pallas.1} parent=11 // pred_check_branch
          %248 = sbr.rel (%p246) target = $region24
        $region23: #{residual_unit_pallas.1} parent=11 // pred_region
          _
        $region24: #{residual_unit_pallas.1} parent=11 // pred_fallthru
          _
        // Predicated region
        $region25: #{residual_unit_pallas.1} parent=11 // pred_check
          %p249 = pneg %p126
        $region26: #{residual_unit_pallas.1} parent=11 // pred_check_branch
          %251 = sbr.rel (%p249) target = $region28
        $region27: #{residual_unit_pallas.1} parent=11 // pred_region
          _
        $region28: #{residual_unit_pallas.1} parent=11 // pred_fallthru
          _
        // Predicated region
        $region29: #{residual_unit_pallas.1} parent=11 // pred_check
          %p252 = pneg %p147
        $region30: #{residual_unit_pallas.1} parent=11 // pred_check_branch
          %254 = sbr.rel (%p252) target = $region32
        $region31: #{residual_unit_pallas.1} parent=11 // pred_region
          %s256 = ssub.s32 16, 16
          %257 = vsyncadd [#allocation4], %s256
          %s259 = sshll.u32 %s5, 4
          %s260 = int_to_ptr.vmem [resolvable:$true] %s259
          %262 = dma.vmem_to_smem %s260, 16, [#allocation3], [#allocation4]
        $region32: #{residual_unit_pallas.1} parent=11 // pred_fallthru
          _
      $region12: #{residual_unit_pallas.1} parent=5 // pred_fallthru
        _
      %p263 = scmp.lt.s32.totalorder %s16, 2
      // Predicated region
      $region33: #{residual_unit_pallas.1} parent=5 // pred_check
        %p264 = pneg %p263
      $region34: #{residual_unit_pallas.1} parent=5 // pred_check_branch
        %266 = sbr.rel (%p264) target = $region36
      $region35: #{residual_unit_pallas.1} parent=5 // pred_region
        // Predicated region
        $region37: #{residual_unit_pallas.1} parent=35 // pred_check
          %p267 = pneg %p36
        $region38: #{residual_unit_pallas.1} parent=35 // pred_check_branch
          %269 = sbr.rel (%p267) target = $region40
        $region39: #{residual_unit_pallas.1} parent=35 // pred_region
          %p270 = scmp.lt.s32.totalorder %s16, 1
          %s271 = scalar_select %p270, %s16, 1
          %s272 = smul.addr %s271, 3
          %s273 = smul.addr %s272, 8
          %s274 = scalar_lea.vmem %s0, %s273
        $region40: #{residual_unit_pallas.1} parent=35 // pred_fallthru
          _
      $region36: #{residual_unit_pallas.1} parent=5 // pred_fallthru
        _
      %p275 = scmp.le.s32.totalorder 1, %s16
      %p276 = scmp.lt.s32.totalorder %s16, 3
      %p277 = pnand %p275, %p276
      %p278 = pneg %p277
      // Predicated region
      $region41: #{residual_unit_pallas.1} parent=5 // pred_check
        _
      $region42: #{residual_unit_pallas.1} parent=5 // pred_check_branch
        %280 = sbr.rel (%p277) target = $region44
      $region43: #{residual_unit_pallas.1} parent=5 // pred_region
        %s281 = ssub.s32 %s16, 1
        // Predicated region
        $region45: #{residual_unit_pallas.1} parent=43 // pred_check
          %p282 = pneg %p147
        $region46: #{residual_unit_pallas.1} parent=43 // pred_check_branch
          %284 = sbr.rel (%p282) target = $region48
        $region47: #{residual_unit_pallas.1} parent=43 // pred_region
          %285 = dma.done [#allocation4], 16
        $region48: #{residual_unit_pallas.1} parent=43 // pred_fallthru
          _
        %286 = sfence
        %p287 = scmp.lt.s32.totalorder %s21, 1
        %s288 = scalar_select %p287, %s21, 1
        %s289 = smul.addr %s288, 3
        %s290 = smul.addr %s289, 8
        %s291 = scalar_lea.vmem %s0, %s290
        %p292 = pneg %p42
        %p293 = pneg %p39
        %p294 = pneg %p63
        %p295 = pneg %p60
        %p296 = pneg %p84
        %p297 = pneg %p81
        %p298 = pneg %p105
        %p299 = pneg %p102
        %p300 = pneg %p126
        %p301 = pneg %p123
        %p302 = pneg %p147
        %p303 = pneg %p144
        %p304 = pneg %p173
        %p305 = pneg %p170
        %p306 = scmp.lt.s32.totalorder %s21, 1
        %s307 = scalar_select %p306, %s21, 1
        %s308 = smul.addr %s307, 3
        %s309 = smul.addr %s308, 8
        %s310 = scalar_lea.vmem %s6, %s309
        %p311 = pneg %p199
        %p312 = pneg %p196
        %p313 = scmp.lt.s32.totalorder %s21, 1
        %s314 = scalar_select %p313, %s21, 1
        %s315 = smul.addr %s314, 3
        %s316 = smul.addr %s315, 8
        %s317 = scalar_lea.vmem %s7, %s316
        %p318 = pneg %p225
        %p319 = pneg %p222
        %p320 = scmp.lt.s32.totalorder %s21, 1
        %s321 = scalar_select %p320, %s21, 1
        %s322 = smul.addr %s321, 3
        %s323 = smul.addr %s322, 8
        %s324 = scalar_lea.vmem %s8, %s323
        %p325 = scmp.lt.s32.totalorder %s21, 1
        %s326 = scalar_select %p325, %s21, 1
        %s327 = smul.addr %s326, 3
        %s328 = smul.addr %s327, 8
        %s329 = scalar_lea.vmem %s0, %s328
        %p330 = scmp.lt.s32.totalorder %s21, 1
        %s331 = scalar_select %p330, %s21, 1
        %s332 = smul.addr %s331, 3
        %s333 = smul.addr %s332, 8
        %s334 = scalar_lea.vmem %s6, %s333
        %p335 = scmp.lt.s32.totalorder %s21, 1
        %s336 = scalar_select %p335, %s21, 1
        %s337 = smul.addr %s336, 3
        %s338 = smul.addr %s337, 8
        %s339 = scalar_lea.vmem %s7, %s338
        %p340 = scmp.lt.s32.totalorder %s21, 1
        %s341 = scalar_select %p340, %s21, 1
        %s342 = smul.addr %s341, 3
        %s343 = smul.addr %s342, 8
        %s344 = scalar_lea.vmem %s8, %s343
        %v345 = vlaneseq
        %v346 = vand.u32 %v345, 127
        %v347 = vadd.s32 %v346, 128
        %v348 = vadd.s32 %v346, 256
        %vm349 = vcmp.lt.s32.totalorder %v346, 0
        %v350 = vsub.s32 0, %v346
        %v351 = vsel %vm349, %v350, %v346
        %v352 = vmul.u32.u64.compose %v351, 3817748708
        %v353 = vextract.low.u32 %v352
        %v354 = vextract.high.u32 %v352
        %v355 = vshrl.u32 %v354, 4
        %v356 = vmul.u32 %v355, 18
        %v357 = vsub.s32 %v351, %v356
        %v358 = vsub.s32 0, %v357
        %v359 = vsel %vm349, %v358, %v357
        %vm360 = vcmp.lt.s32.totalorder %v347, 0
        %v361 = vsub.s32 0, %v347
        %v362 = vsel %vm360, %v361, %v347
        %v363 = vmul.u32.u64.compose %v362, 3817748708
        %v364 = vextract.low.u32 %v363
        %v365 = vextract.high.u32 %v363
        %v366 = vshrl.u32 %v365, 4
        %v367 = vmul.u32 %v366, 18
        %v368 = vsub.s32 %v362, %v367
        %v369 = vsub.s32 0, %v368
        %v370 = vsel %vm360, %v369, %v368
        %vm371 = vcmp.lt.s32.totalorder %v348, 0
        %v372 = vsub.s32 0, %v348
        %v373 = vsel %vm371, %v372, %v348
        %v374 = vmul.u32.u64.compose %v373, 3817748708
        %v375 = vextract.low.u32 %v374
        %v376 = vextract.high.u32 %v374
        %v377 = vshrl.u32 %v376, 4
        %v378 = vmul.u32 %v377, 18
        %v379 = vsub.s32 %v373, %v378
        %v380 = vsub.s32 0, %v379
        %v381 = vsel %vm371, %v380, %v379
        %vm382 = vcmp.ne.s32.totalorder %v359, 0
        %vm383 = vcmp.ne.s32.totalorder %v370, 0
        %vm384 = vcmp.ne.s32.totalorder %v381, 0
        %vm385 = vcmp.lt.s32.totalorder %v359, 0
        %vm386 = vcmp.lt.s32.totalorder %v370, 0
        %vm387 = vcmp.lt.s32.totalorder %v381, 0
        %vm388 = vmand %vm385, %vm382
        %vm389 = vmand %vm386, %vm383
        %vm390 = vmand %vm387, %vm384
        %v391 = vadd.s32 %v359, 18
        %v392 = vadd.s32 %v370, 18
        %v393 = vadd.s32 %v381, 18
        %v394 = vsel %vm388, %v391, %v359
        %v395 = vsel %vm389, %v392, %v370
        %v396 = vsel %vm390, %v393, %v381
        %vm397 = vcmp.lt.s32.totalorder %v394, 16
        %vm398 = vcmp.lt.s32.totalorder %v395, 16
        %vm399 = vcmp.lt.s32.totalorder %v396, 16
        %v400 = vsel %vm397, 1, 0
        %v401 = vsel %vm398, 1, 0
        %v402 = vsel %vm399, 1, 0
        %v403 = vcvt.s32.f32 %v400
        %v404 = vcvt.s32.f32 %v401
        %v405 = vcvt.s32.f32 %v402
        %v406 = vld [vmem:[%s329] sm:$0xff]
        %v407 = vld [vmem:[%s329 + $0x8] sm:$0xff]
        %v408 = vld [vmem:[%s329 + $0x10] sm:$0xff]
        %412 = vrot.lane.b32.xlu0 %v406, 127
        %v413 = vpop.permute.xlu0 %412
        %414 = vrot.lane.b32.xlu0 %v407, 127
        %v415 = vpop.permute.xlu0 %414
        %416 = vrot.lane.b32.xlu0 %v408, 127
        %v417 = vpop.permute.xlu0 %416
        %vm418 = vcmask 1039360
        %v419 = vsel %vm418, %v413, %v415
        %v420 = vsel %vm418, %v415, %v417
        %424 = vrot.lane.b32.xlu0 %v406, 126
        %v425 = vpop.permute.xlu0 %424
        %426 = vrot.lane.b32.xlu0 %v407, 126
        %v427 = vpop.permute.xlu0 %426
        %428 = vrot.lane.b32.xlu0 %v408, 126
        %v429 = vpop.permute.xlu0 %428
        %vm430 = vcmask 1031168
        %v431 = vsel %vm430, %v425, %v427
        %v432 = vsel %vm430, %v427, %v429
        %436 = vrot.lane.b32.xlu0 %v406, 110
        %v437 = vpop.permute.xlu0 %436
        %438 = vrot.lane.b32.xlu0 %v407, 110
        %v439 = vpop.permute.xlu0 %438
        %440 = vrot.lane.b32.xlu0 %v408, 110
        %v441 = vpop.permute.xlu0 %440
        %vm442 = vcmask 900096
        %v443 = vsel %vm442, %v437, %v439
        %v444 = vsel %vm442, %v439, %v441
        %448 = vrot.lane.b32.xlu0 %v406, 109
        %v449 = vpop.permute.xlu0 %448
        %450 = vrot.lane.b32.xlu0 %v407, 109
        %v451 = vpop.permute.xlu0 %450
        %452 = vrot.lane.b32.xlu0 %v408, 109
        %v453 = vpop.permute.xlu0 %452
        %vm454 = vcmask 891904
        %v455 = vsel %vm454, %v449, %v451
        %v456 = vsel %vm454, %v451, %v453
        %460 = vrot.lane.b32.xlu0 %v406, 108
        %v461 = vpop.permute.xlu0 %460
        %462 = vrot.lane.b32.xlu0 %v407, 108
        %v463 = vpop.permute.xlu0 %462
        %464 = vrot.lane.b32.xlu0 %v408, 108
        %v465 = vpop.permute.xlu0 %464
        %vm466 = vcmask 883712
        %v467 = vsel %vm466, %v461, %v463
        %v468 = vsel %vm466, %v463, %v465
        %472 = vrot.lane.b32.xlu0 %v406, 92
        %v473 = vpop.permute.xlu0 %472
        %474 = vrot.lane.b32.xlu0 %v407, 92
        %v475 = vpop.permute.xlu0 %474
        %476 = vrot.lane.b32.xlu0 %v408, 92
        %v477 = vpop.permute.xlu0 %476
        %vm478 = vcmask 752640
        %v479 = vsel %vm478, %v473, %v475
        %v480 = vsel %vm478, %v475, %v477
        %484 = vrot.lane.b32.xlu0 %v406, 91
        %v485 = vpop.permute.xlu0 %484
        %486 = vrot.lane.b32.xlu0 %v407, 91
        %v487 = vpop.permute.xlu0 %486
        %488 = vrot.lane.b32.xlu0 %v408, 91
        %v489 = vpop.permute.xlu0 %488
        %vm490 = vcmask 744448
        %v491 = vsel %vm490, %v485, %v487
        %v492 = vsel %vm490, %v487, %v489
        %496 = vrot.lane.b32.xlu0 %v406, 90
        %v497 = vpop.permute.xlu0 %496
        %498 = vrot.lane.b32.xlu0 %v407, 90
        %v499 = vpop.permute.xlu0 %498
        %500 = vrot.lane.b32.xlu0 %v408, 90
        %v501 = vpop.permute.xlu0 %500
        %vm502 = vcmask 736256
        %v503 = vsel %vm502, %v497, %v499
        %v504 = vsel %vm502, %v499, %v501
        %v508 = vld [vmem:[%s1] sm:$0xff]
        %v509 = vld [vmem:[%s1 + $0x8] sm:$0xff]
        %v510 = vld [vmem:[%s2] sm:$0xff]
        %v511 = vld [vmem:[%s2 + $0x8] sm:$0xff]
        %513 = vset.pattern.permute.xlu0 0
        %514 = vperm.xlu0 %513, %v510
        %v515 = vpop.permute.xlu0 %514
        %518 = vset.pattern.permute.xlu0 0
        %519 = vperm.xlu0 %518, %v511
        %v520 = vpop.permute.xlu0 %519
        %vm522 = vcmask 588800
        %v524 = vsel %vm522, %v508, 0
        %v527 = vsel %vm522, %v509, 0
        %529 = vmatprep.subr.mxu0 %v407
        %530 = vmatpush1.msra.mxu0 %v406
        %531 = vmatprep.subr.mxu0 %v420
        %532 = vmatpush1.msra.mxu0 %v419
        %533 = vmatprep.subr.mxu0 %v432
        %534 = vmatpush1.msra.mxu0 %v431
        %535 = vmatprep.subr.mxu0 %v444
        %536 = vmatpush1.msra.mxu0 %v443
        %537 = vmatprep.subr.mxu0 %v456
        %538 = vmatpush1.msra.mxu0 %v455
        %539 = vmatprep.subr.mxu0 %v468
        %540 = vmatpush1.msra.mxu0 %v467
        %541 = vmatprep.subr.mxu0 %v480
        %542 = vmatpush1.msra.mxu0 %v479
        %543 = vmatprep.subr.mxu0 %v492
        %544 = vmatpush1.msra.mxu0 %v491
        %545 = vmatprep.subr.mxu0 %v504
        %546 = vmatpush1.msra.mxu0 %v503
        %547 = vmatprep.subr.mxu0 0.0
        %548 = vmatpush1.msra.mxu0 0.0
        %549 = vmatprep.subr.mxu0 0.0
        %550 = vmatpush1.msra.mxu0 0.0
        %551 = vmatprep.subr.mxu0 0.0
        %552 = vmatpush1.msra.mxu0 0.0
        %553 = vmatprep.subr.mxu0 0.0
        %554 = vmatpush1.msra.mxu0 0.0
        %555 = vmatprep.subr.mxu0 0.0
        %556 = vmatpush1.msra.mxu0 0.0
        %557 = vmatprep.subr.mxu0 0.0
        %558 = vmatpush1.msra.mxu0 0.0
        %559 = vmatprep.subr.mxu0 0.0
        %560 = vmatpush1.msra.mxu0 0.0
        %561 = vmatprep.subr.mxu0 0.0
        %562 = vmatpush1.msra.mxu0 0.0
        %563 = vmatprep.subr.mxu0 0.0
        %564 = vmatpush1.msra.mxu0 0.0
        %565 = vmatprep.subr.mxu0 0.0
        %566 = vmatpush1.msra.mxu0 0.0
        %567 = vmatprep.subr.mxu0 0.0
        %568 = vmatpush1.msra.mxu0 0.0
        %569 = vmatprep.subr.mxu0 0.0
        %570 = vmatpush1.msra.mxu0 0.0
        %571 = vmatprep.subr.mxu0 0.0
        %572 = vmatpush1.msra.mxu0 0.0
        %573 = vmatprep.subr.mxu0 0.0
        %574 = vmatpush1.msra.mxu0 0.0
        %575 = vmatprep.subr.mxu0 0.0
        %576 = vmatpush1.msra.mxu0 0.0
        %577 = vmatprep.subr.mxu0 0.0
        %578 = vmatpush1.msra.mxu0 0.0
        %579 = vmatprep.subr.mxu0 0.0
        %580 = vmatpush1.msra.mxu0 0.0
        %581 = vmatprep.subr.mxu0 0.0
        %582 = vmatpush1.msra.mxu0 0.0
        %583 = vmatprep.subr.mxu0 0.0
        %584 = vmatpush1.msra.mxu0 0.0
        %585 = vmatprep.subr.mxu0 0.0
        %586 = vmatpush1.msra.mxu0 0.0
        %587 = vmatprep.subr.mxu0 0.0
        %588 = vmatpush1.msra.mxu0 0.0
        %589 = vmatprep.subr.mxu0 0.0
        %590 = vmatpush1.msra.mxu0 0.0
        %591 = vmatprep.subr.mxu0 0.0
        %592 = vmatpush1.msra.mxu0 0.0
        %593 = vmatprep.mubr.f32.mxu0 0.0
        %594 = vmatmul.mubr.f32.gmra.mrb[0].mxu0 %v524
        %v595 = vpop.f32.mrb[0].mxu0
        %v596 = vadd.f32 %v515, %v595
        %v597 = vpop.f32.mrb[0].mxu0
        %v598 = vadd.f32 %v515, %v597
        %599 = vmatprep.mubr.f32.mxu0 0.0
        %600 = vmatmul.mubr.f32.gmra.mrb[0].mxu0 %v527
        %v601 = vpop.f32.mrb[0].mxu0
        %v602 = vadd.f32 %v520, %v601
        %v603 = vpop.f32.mrb[0].mxu0
        %v604 = vadd.f32 %v520, %v603
        %605 = vdwg.mxu0
        %606 = vmatprep.subr.mxu0 0.0
        %607 = vmatpush1.msra.mxu0 %v408
        %608 = vmatprep.subr.mxu0 0.0
        %609 = vmatpush1.msra.mxu0 %v417
        %610 = vmatprep.subr.mxu0 0.0
        %611 = vmatpush1.msra.mxu0 %v429
        %612 = vmatprep.subr.mxu0 0.0
        %613 = vmatpush1.msra.mxu0 %v441
        %614 = vmatprep.subr.mxu0 0.0
        %615 = vmatpush1.msra.mxu0 %v453
        %616 = vmatprep.subr.mxu0 0.0
        %617 = vmatpush1.msra.mxu0 %v465
        %618 = vmatprep.subr.mxu0 0.0
        %619 = vmatpush1.msra.mxu0 %v477
        %620 = vmatprep.subr.mxu0 0.0
        %621 = vmatpush1.msra.mxu0 %v489
        %622 = vmatprep.subr.mxu0 0.0
        %623 = vmatpush1.msra.mxu0 %v501
        %624 = vmatprep.subr.mxu0 0.0
        %625 = vmatpush1.msra.mxu0 0.0
        %626 = vmatprep.subr.mxu0 0.0
        %627 = vmatpush1.msra.mxu0 0.0
        %628 = vmatprep.subr.mxu0 0.0
        %629 = vmatpush1.msra.mxu0 0.0
        %630 = vmatprep.subr.mxu0 0.0
        %631 = vmatpush1.msra.mxu0 0.0
        %632 = vmatprep.subr.mxu0 0.0
        %633 = vmatpush1.msra.mxu0 0.0
        %634 = vmatprep.subr.mxu0 0.0
        %635 = vmatpush1.msra.mxu0 0.0
        %636 = vmatprep.subr.mxu0 0.0
        %637 = vmatpush1.msra.mxu0 0.0
        %638 = vmatprep.subr.mxu0 0.0
        %639 = vmatpush1.msra.mxu0 0.0
        %640 = vmatprep.subr.mxu0 0.0
        %641 = vmatpush1.msra.mxu0 0.0
        %642 = vmatprep.subr.mxu0 0.0
        %643 = vmatpush1.msra.mxu0 0.0
        %644 = vmatprep.subr.mxu0 0.0
        %645 = vmatpush1.msra.mxu0 0.0
        %646 = vmatprep.subr.mxu0 0.0
        %647 = vmatpush1.msra.mxu0 0.0
        %648 = vmatprep.subr.mxu0 0.0
        %649 = vmatpush1.msra.mxu0 0.0
        %650 = vmatprep.subr.mxu0 0.0
        %651 = vmatpush1.msra.mxu0 0.0
        %652 = vmatprep.subr.mxu0 0.0
        %653 = vmatpush1.msra.mxu0 0.0
        %654 = vmatprep.subr.mxu0 0.0
        %655 = vmatpush1.msra.mxu0 0.0
        %656 = vmatprep.subr.mxu0 0.0
        %657 = vmatpush1.msra.mxu0 0.0
        %658 = vmatprep.subr.mxu0 0.0
        %659 = vmatpush1.msra.mxu0 0.0
        %660 = vmatprep.subr.mxu0 0.0
        %661 = vmatpush1.msra.mxu0 0.0
        %662 = vmatprep.subr.mxu0 0.0
        %663 = vmatpush1.msra.mxu0 0.0
        %664 = vmatprep.subr.mxu0 0.0
        %665 = vmatpush1.msra.mxu0 0.0
        %666 = vmatprep.subr.mxu0 0.0
        %667 = vmatpush1.msra.mxu0 0.0
        %668 = vmatprep.subr.mxu0 0.0
        %669 = vmatpush1.msra.mxu0 0.0
        %670 = vmatprep.mubr.f32.mxu0 0.0
        %671 = vmatmul.mubr.f32.gmra.mrb[0].mxu0 %v524
        %v672 = vpop.f32.mrb[0].mxu0
        %v673 = vadd.f32 %v515, %v672
        %v674 = vpop.f32.mrb[0].mxu0
        %675 = vmatprep.mubr.f32.mxu0 0.0
        %676 = vmatmul.mubr.f32.gmra.mrb[0].mxu0 %v527
        %v677 = vpop.f32.mrb[0].mxu0
        %v678 = vadd.f32 %v520, %v677
        %v679 = vpop.f32.mrb[0].mxu0
        %680 = vdwg.mxu0
        %s681 = sld [smem:[#allocation3]]
        %v682 = vmul.f32 %v596, %v403
        %v683 = vmul.f32 %v598, %v404
        %v684 = vmul.f32 %v673, %v405
        %v685 = vadd.f32 %v682, %v683
        %vm686 = vcmask 261120
        %v687 = vsel %vm686, %v684, 0.0
        %v688 = vadd.f32 %v685, %v687
        %689 = vadd.xlane.f32.xlu0 %v688
        %v690 = vpop.xlane.xlu0 %689
        %v691 = vmul.f32 %v682, %v596
        %v692 = vmul.f32 %v683, %v598
        %v693 = vmul.f32 %v684, %v673
        %v694 = vadd.f32 %v691, %v692
        %v695 = vsel %vm686, %v693, 0.0
        %v696 = vadd.f32 %v694, %v695
        %697 = vadd.xlane.f32.xlu0 %v696
        %v698 = vpop.xlane.xlu0 %697
        %v699 = vmul.f32 %v690, 0.00390625
        %v700 = vmul.f32 %v698, 0.00390625
        %v701 = vmul.f32 %v699, %v699
        %v702 = vsub.f32 %v700, %v701
        %v703 = vmax.f32 %v702, 0.0
        %v704 = vsub.f32 %v596, %v699
        %v705 = vsub.f32 %v598, %v699
        %v706 = vsub.f32 %v673, %v699
        %v707 = vadd.f32 %v703, 1e-05
        %v708 = vrsqrt.pop %v707
        %v709 = vmul.f32 %v704, %v708
        %v710 = vmul.f32 %v705, %v708
        %v711 = vmul.f32 %v706, %v708
        %vm712 = vcmp.ge.f32.partialorder %v709, 0.0
        %vm713 = vcmp.ge.f32.partialorder %v710, 0.0
        %vm714 = vcmp.ge.f32.partialorder %v711, 0.0
        %v715 = vstv %s681
        %v716 = vmul.f32 %v715, %v709
        %v717 = vmul.f32 %v715, %v710
        %v718 = vmul.f32 %v715, %v711
        %v719 = vsel %vm712, %v709, %v716
        %v720 = vsel %vm713, %v710, %v717
        %v721 = vsel %vm714, %v711, %v718
        %vm722 = vcmp.eq.s32.totalorder %v400, 1
        %vm723 = vcmp.eq.s32.totalorder %v401, 1
        %vm724 = vcmp.eq.s32.totalorder %v402, 1
        %v725 = vsel %vm722, %v719, 0.0
        %v726 = vsel %vm723, %v720, 0.0
        %v727 = vsel %vm724, %v721, 0.0
        %728 = vst [vmem:[#allocation2] sm:$0xff] 0.0
        %729 = vst [vmem:[#allocation2 + $0x8] sm:$0xff] 0.0
        %vm730 = vcmask 703488
        %731 = vst.msk [vmem:[#allocation2 + $0x10] sm:$0xff] %vm730, 0.0
        %735 = vrot.lane.b32.xlu0 %v725, 19
        %v736 = vpop.permute.xlu0 %735
        %737 = vrot.lane.b32.xlu0 %v726, 19
        %v738 = vpop.permute.xlu0 %737
        %739 = vrot.lane.b32.xlu0 %v727, 19
        %v740 = vpop.permute.xlu0 %739
        %vm741 = vcmask 154624
        %v742 = vsel %vm741, %v736, %v738
        %v743 = vsel %vm741, %v738, %v740
        %vm747 = vcmask 1047704
        %748 = vst.msk [vmem:[#allocation2] sm:$0xff] %vm747, %v736
        %749 = vst [vmem:[#allocation2 + $0x8] sm:$0xff] %v742
        %vm750 = vcmask 416768
        %751 = vst.msk [vmem:[#allocation2 + $0x10] sm:$0xff] %vm750, %v743
        %v752 = vld [vmem:[#allocation2] sm:$0xff]
        %v753 = vld [vmem:[#allocation2 + $0x8] sm:$0xff]
        %v754 = vld [vmem:[#allocation2 + $0x10] sm:$0xff]
        %758 = vrot.lane.b32.xlu0 %v752, 127
        %v759 = vpop.permute.xlu0 %758
        %760 = vrot.lane.b32.xlu0 %v753, 127
        %v761 = vpop.permute.xlu0 %760
        %762 = vrot.lane.b32.xlu0 %v754, 127
        %v763 = vpop.permute.xlu0 %762
        %v764 = vsel %vm418, %v759, %v761
        %v765 = vsel %vm418, %v761, %v763
        %769 = vrot.lane.b32.xlu0 %v752, 126
        %v770 = vpop.permute.xlu0 %769
        %771 = vrot.lane.b32.xlu0 %v753, 126
        %v772 = vpop.permute.xlu0 %771
        %773 = vrot.lane.b32.xlu0 %v754, 126
        %v774 = vpop.permute.xlu0 %773
        %v775 = vsel %vm430, %v770, %v772
        %v776 = vsel %vm430, %v772, %v774
        %780 = vrot.lane.b32.xlu0 %v752, 110
        %v781 = vpop.permute.xlu0 %780
        %782 = vrot.lane.b32.xlu0 %v753, 110
        %v783 = vpop.permute.xlu0 %782
        %784 = vrot.lane.b32.xlu0 %v754, 110
        %v785 = vpop.permute.xlu0 %784
        %v786 = vsel %vm442, %v781, %v783
        %v787 = vsel %vm442, %v783, %v785
        %791 = vrot.lane.b32.xlu0 %v752, 109
        %v792 = vpop.permute.xlu0 %791
        %793 = vrot.lane.b32.xlu0 %v753, 109
        %v794 = vpop.permute.xlu0 %793
        %795 = vrot.lane.b32.xlu0 %v754, 109
        %v796 = vpop.permute.xlu0 %795
        %v797 = vsel %vm454, %v792, %v794
        %v798 = vsel %vm454, %v794, %v796
        %802 = vrot.lane.b32.xlu0 %v752, 108
        %v803 = vpop.permute.xlu0 %802
        %804 = vrot.lane.b32.xlu0 %v753, 108
        %v805 = vpop.permute.xlu0 %804
        %806 = vrot.lane.b32.xlu0 %v754, 108
        %v807 = vpop.permute.xlu0 %806
        %v808 = vsel %vm466, %v803, %v805
        %v809 = vsel %vm466, %v805, %v807
        %813 = vrot.lane.b32.xlu0 %v752, 92
        %v814 = vpop.permute.xlu0 %813
        %815 = vrot.lane.b32.xlu0 %v753, 92
        %v816 = vpop.permute.xlu0 %815
        %817 = vrot.lane.b32.xlu0 %v754, 92
        %v818 = vpop.permute.xlu0 %817
        %v819 = vsel %vm478, %v814, %v816
        %v820 = vsel %vm478, %v816, %v818
        %824 = vrot.lane.b32.xlu0 %v752, 91
        %v825 = vpop.permute.xlu0 %824
        %826 = vrot.lane.b32.xlu0 %v753, 91
        %v827 = vpop.permute.xlu0 %826
        %828 = vrot.lane.b32.xlu0 %v754, 91
        %v829 = vpop.permute.xlu0 %828
        %v830 = vsel %vm490, %v825, %v827
        %v831 = vsel %vm490, %v827, %v829
        %835 = vrot.lane.b32.xlu0 %v752, 90
        %v836 = vpop.permute.xlu0 %835
        %837 = vrot.lane.b32.xlu0 %v753, 90
        %v838 = vpop.permute.xlu0 %837
        %839 = vrot.lane.b32.xlu0 %v754, 90
        %v840 = vpop.permute.xlu0 %839
        %v841 = vsel %vm502, %v836, %v838
        %v842 = vsel %vm502, %v838, %v840
        %v846 = vld [vmem:[%s3] sm:$0xff]
        %v847 = vld [vmem:[%s4] sm:$0xff]
        %849 = vset.pattern.permute.xlu0 0
        %850 = vperm.xlu0 %849, %v847
        %v851 = vpop.permute.xlu0 %850
        %v854 = vsel %vm522, %v846, 0
        %856 = vmatprep.subr.mxu0 %v753
        %857 = vmatpush1.msra.mxu0 %v752
        %858 = vmatprep.subr.mxu0 %v765
        %859 = vmatpush1.msra.mxu0 %v764
        %860 = vmatprep.subr.mxu0 %v776
        %861 = vmatpush1.msra.mxu0 %v775
        %862 = vmatprep.subr.mxu0 %v787
        %863 = vmatpush1.msra.mxu0 %v786
        %864 = vmatprep.subr.mxu0 %v798
        %865 = vmatpush1.msra.mxu0 %v797
        %866 = vmatprep.subr.mxu0 %v809
        %867 = vmatpush1.msra.mxu0 %v808
        %868 = vmatprep.subr.mxu0 %v820
        %869 = vmatpush1.msra.mxu0 %v819
        %870 = vmatprep.subr.mxu0 %v831
        %871 = vmatpush1.msra.mxu0 %v830
        %872 = vmatprep.subr.mxu0 %v842
        %873 = vmatpush1.msra.mxu0 %v841
        %874 = vmatprep.subr.mxu0 0.0
        %875 = vmatpush1.msra.mxu0 0.0
        %876 = vmatprep.subr.mxu0 0.0
        %877 = vmatpush1.msra.mxu0 0.0
        %878 = vmatprep.subr.mxu0 0.0
        %879 = vmatpush1.msra.mxu0 0.0
        %880 = vmatprep.subr.mxu0 0.0
        %881 = vmatpush1.msra.mxu0 0.0
        %882 = vmatprep.subr.mxu0 0.0
        %883 = vmatpush1.msra.mxu0 0.0
        %884 = vmatprep.subr.mxu0 0.0
        %885 = vmatpush1.msra.mxu0 0.0
        %886 = vmatprep.subr.mxu0 0.0
        %887 = vmatpush1.msra.mxu0 0.0
        %888 = vmatprep.subr.mxu0 0.0
        %889 = vmatpush1.msra.mxu0 0.0
        %890 = vmatprep.subr.mxu0 0.0
        %891 = vmatpush1.msra.mxu0 0.0
        %892 = vmatprep.subr.mxu0 0.0
        %893 = vmatpush1.msra.mxu0 0.0
        %894 = vmatprep.subr.mxu0 0.0
        %895 = vmatpush1.msra.mxu0 0.0
        %896 = vmatprep.subr.mxu0 0.0
        %897 = vmatpush1.msra.mxu0 0.0
        %898 = vmatprep.subr.mxu0 0.0
        %899 = vmatpush1.msra.mxu0 0.0
        %900 = vmatprep.subr.mxu0 0.0
        %901 = vmatpush1.msra.mxu0 0.0
        %902 = vmatprep.subr.mxu0 0.0
        %903 = vmatpush1.msra.mxu0 0.0
        %904 = vmatprep.subr.mxu0 0.0
        %905 = vmatpush1.msra.mxu0 0.0
        %906 = vmatprep.subr.mxu0 0.0
        %907 = vmatpush1.msra.mxu0 0.0
        %908 = vmatprep.subr.mxu0 0.0
        %909 = vmatpush1.msra.mxu0 0.0
        %910 = vmatprep.subr.mxu0 0.0
        %911 = vmatpush1.msra.mxu0 0.0
        %912 = vmatprep.subr.mxu0 0.0
        %913 = vmatpush1.msra.mxu0 0.0
        %914 = vmatprep.subr.mxu0 0.0
        %915 = vmatpush1.msra.mxu0 0.0
        %916 = vmatprep.subr.mxu0 0.0
        %917 = vmatpush1.msra.mxu0 0.0
        %918 = vmatprep.subr.mxu0 0.0
        %919 = vmatpush1.msra.mxu0 0.0
        %920 = vmatprep.mubr.f32.mxu0 0.0
        %921 = vmatmul.mubr.f32.gmra.mrb[0].mxu0 %v854
        %v922 = vpop.f32.mrb[0].mxu0
        %v923 = vadd.f32 %v851, %v922
        %v924 = vpop.f32.mrb[0].mxu0
        %v925 = vadd.f32 %v851, %v924
        %926 = vdwg.mxu0
        %927 = vmatprep.subr.mxu0 0.0
        %928 = vmatpush1.msra.mxu0 %v754
        %929 = vmatprep.subr.mxu0 0.0
        %930 = vmatpush1.msra.mxu0 %v763
        %931 = vmatprep.subr.mxu0 0.0
        %932 = vmatpush1.msra.mxu0 %v774
        %933 = vmatprep.subr.mxu0 0.0
        %934 = vmatpush1.msra.mxu0 %v785
        %935 = vmatprep.subr.mxu0 0.0
        %936 = vmatpush1.msra.mxu0 %v796
        %937 = vmatprep.subr.mxu0 0.0
        %938 = vmatpush1.msra.mxu0 %v807
        %939 = vmatprep.subr.mxu0 0.0
        %940 = vmatpush1.msra.mxu0 %v818
        %941 = vmatprep.subr.mxu0 0.0
        %942 = vmatpush1.msra.mxu0 %v829
        %943 = vmatprep.subr.mxu0 0.0
        %944 = vmatpush1.msra.mxu0 %v840
        %945 = vmatprep.subr.mxu0 0.0
        %946 = vmatpush1.msra.mxu0 0.0
        %947 = vmatprep.subr.mxu0 0.0
        %948 = vmatpush1.msra.mxu0 0.0
        %949 = vmatprep.subr.mxu0 0.0
        %950 = vmatpush1.msra.mxu0 0.0
        %951 = vmatprep.subr.mxu0 0.0
        %952 = vmatpush1.msra.mxu0 0.0
        %953 = vmatprep.subr.mxu0 0.0
        %954 = vmatpush1.msra.mxu0 0.0
        %955 = vmatprep.subr.mxu0 0.0
        %956 = vmatpush1.msra.mxu0 0.0
        %957 = vmatprep.subr.mxu0 0.0
        %958 = vmatpush1.msra.mxu0 0.0
        %959 = vmatprep.subr.mxu0 0.0
        %960 = vmatpush1.msra.mxu0 0.0
        %961 = vmatprep.subr.mxu0 0.0
        %962 = vmatpush1.msra.mxu0 0.0
        %963 = vmatprep.subr.mxu0 0.0
        %964 = vmatpush1.msra.mxu0 0.0
        %965 = vmatprep.subr.mxu0 0.0
        %966 = vmatpush1.msra.mxu0 0.0
        %967 = vmatprep.subr.mxu0 0.0
        %968 = vmatpush1.msra.mxu0 0.0
        %969 = vmatprep.subr.mxu0 0.0
        %970 = vmatpush1.msra.mxu0 0.0
        %971 = vmatprep.subr.mxu0 0.0
        %972 = vmatpush1.msra.mxu0 0.0
        %973 = vmatprep.subr.mxu0 0.0
        %974 = vmatpush1.msra.mxu0 0.0
        %975 = vmatprep.subr.mxu0 0.0
        %976 = vmatpush1.msra.mxu0 0.0
        %977 = vmatprep.subr.mxu0 0.0
        %978 = vmatpush1.msra.mxu0 0.0
        %979 = vmatprep.subr.mxu0 0.0
        %980 = vmatpush1.msra.mxu0 0.0
        %981 = vmatprep.subr.mxu0 0.0
        %982 = vmatpush1.msra.mxu0 0.0
        %983 = vmatprep.subr.mxu0 0.0
        %984 = vmatpush1.msra.mxu0 0.0
        %985 = vmatprep.subr.mxu0 0.0
        %986 = vmatpush1.msra.mxu0 0.0
        %987 = vmatprep.subr.mxu0 0.0
        %988 = vmatpush1.msra.mxu0 0.0
        %989 = vmatprep.subr.mxu0 0.0
        %990 = vmatpush1.msra.mxu0 0.0
        %991 = vmatprep.mubr.f32.mxu0 0.0
        %992 = vmatmul.mubr.f32.gmra.mrb[0].mxu0 %v854
        %v993 = vpop.f32.mrb[0].mxu0
        %v994 = vadd.f32 %v851, %v993
        %v995 = vpop.f32.mrb[0].mxu0
        %996 = vdwg.mxu0
        %s997 = sld [smem:[#allocation3 + $0x1]]
        %v998 = vmul.f32 %v923, %v403
        %v999 = vmul.f32 %v925, %v404
        %v1000 = vmul.f32 %v994, %v405
        %v1001 = vadd.f32 %v998, %v999
        %v1002 = vsel %vm686, %v1000, 0.0
        %v1003 = vadd.f32 %v1001, %v1002
        %1004 = vadd.xlane.f32.xlu0 %v1003
        %v1005 = vpop.xlane.xlu0 %1004
        %v1006 = vmul.f32 %v998, %v923
        %v1007 = vmul.f32 %v999, %v925
        %v1008 = vmul.f32 %v1000, %v994
        %v1009 = vadd.f32 %v1006, %v1007
        %v1010 = vsel %vm686, %v1008, 0.0
        %v1011 = vadd.f32 %v1009, %v1010
        %1012 = vadd.xlane.f32.xlu0 %v1011
        %v1013 = vpop.xlane.xlu0 %1012
        %v1014 = vmul.f32 %v1005, 0.00390625
        %v1015 = vmul.f32 %v1013, 0.00390625
        %v1016 = vmul.f32 %v1014, %v1014
        %v1017 = vsub.f32 %v1015, %v1016
        %v1018 = vmax.f32 %v1017, 0.0
        %v1019 = vsub.f32 %v923, %v1014
        %v1020 = vsub.f32 %v925, %v1014
        %v1021 = vsub.f32 %v994, %v1014
        %v1022 = vadd.f32 %v1018, 1e-05
        %v1023 = vrsqrt.pop %v1022
        %v1024 = vmul.f32 %v1019, %v1023
        %v1025 = vmul.f32 %v1020, %v1023
        %v1026 = vmul.f32 %v1021, %v1023
        %vm1027 = vcmp.ge.f32.partialorder %v1024, 0.0
        %vm1028 = vcmp.ge.f32.partialorder %v1025, 0.0
        %vm1029 = vcmp.ge.f32.partialorder %v1026, 0.0
        %v1030 = vstv %s997
        %v1031 = vmul.f32 %v1030, %v1024
        %v1032 = vmul.f32 %v1030, %v1025
        %v1033 = vmul.f32 %v1030, %v1026
        %v1034 = vsel %vm1027, %v1024, %v1031
        %v1035 = vsel %vm1028, %v1025, %v1032
        %v1036 = vsel %vm1029, %v1026, %v1033
        %1037 = vst [vmem:[%s339] sm:$0xff] %v725
        %1038 = vst [vmem:[%s339 + $0x8] sm:$0xff] %v726
        %1039 = vst.msk [vmem:[%s339 + $0x10] sm:$0xff] %vm686, %v727
        %1040 = vst [vmem:[%s344] sm:$0xff] %v1034
        %1041 = vst [vmem:[%s344 + $0x8] sm:$0xff] %v1035
        %1042 = vst.msk [vmem:[%s344 + $0x10] sm:$0xff] %vm686, %v1036
        %v1043 = vadd.f32 %v1034, %v602
        %v1044 = vadd.f32 %v1035, %v604
        %v1045 = vadd.f32 %v1036, %v678
        %1046 = vst [vmem:[%s334] sm:$0xff] %v1043
        %1047 = vst [vmem:[%s334 + $0x8] sm:$0xff] %v1044
        %1048 = vst.msk [vmem:[%s334 + $0x10] sm:$0xff] %vm686, %v1045
        %p1049 = scmp.lt.s32.totalorder %s21, 1
        %s1050 = scalar_select %p1049, %s21, 1
        %s1051 = smul.addr %s1050, 3
        %s1052 = smul.addr %s1051, 8
        %s1053 = scalar_lea.vmem %s6, %s1052
        %p1054 = scmp.lt.s32.totalorder %s21, 1
        %s1055 = scalar_select %p1054, %s21, 1
        %s1056 = smul.addr %s1055, 3
        %s1057 = smul.addr %s1056, 8
        %s1058 = scalar_lea.vmem %s7, %s1057
        %p1059 = scmp.lt.s32.totalorder %s21, 1
        %s1060 = scalar_select %p1059, %s21, 1
        %s1061 = smul.addr %s1060, 3
        %s1062 = smul.addr %s1061, 8
        %s1063 = scalar_lea.vmem %s8, %s1062
        // Predicated region
        $region49: #{residual_unit_pallas.1} parent=43 // pred_check
          %p1064 = pneg %p170
        $region50: #{residual_unit_pallas.1} parent=43 // pred_check_branch
          %1066 = sbr.rel (%p1064) target = $region52
        $region51: #{residual_unit_pallas.1} parent=43 // pred_region
          _
        $region52: #{residual_unit_pallas.1} parent=43 // pred_fallthru
          _
        // Predicated region
        $region53: #{residual_unit_pallas.1} parent=43 // pred_check
          %p1067 = pneg %p196
        $region54: #{residual_unit_pallas.1} parent=43 // pred_check_branch
          %1069 = sbr.rel (%p1067) target = $region56
        $region55: #{residual_unit_pallas.1} parent=43 // pred_region
          _
        $region56: #{residual_unit_pallas.1} parent=43 // pred_fallthru
          _
        // Predicated region
        $region57: #{residual_unit_pallas.1} parent=43 // pred_check
          %p1070 = pneg %p222
        $region58: #{residual_unit_pallas.1} parent=43 // pred_check_branch
          %1072 = sbr.rel (%p1070) target = $region60
        $region59: #{residual_unit_pallas.1} parent=43 // pred_region
          _
        $region60: #{residual_unit_pallas.1} parent=43 // pred_fallthru
          _
      $region44: #{residual_unit_pallas.1} parent=5 // pred_fallthru
        _
      %p1073 = scmp.le.s32.totalorder 2, %s16
      // Predicated region
      $region61: #{residual_unit_pallas.1} parent=5 // pred_check
        %p1074 = pneg %p1073
      $region62: #{residual_unit_pallas.1} parent=5 // pred_check_branch
        %1076 = sbr.rel (%p1074) target = $region64
      $region63: #{residual_unit_pallas.1} parent=5 // pred_region
        %s1077 = ssub.s32 %s16, 2
        // Predicated region
        $region65: #{residual_unit_pallas.1} parent=63 // pred_check
          %p1078 = pneg %p176
        $region66: #{residual_unit_pallas.1} parent=63 // pred_check_branch
          %1080 = sbr.rel (%p1078) target = $region68
        $region67: #{residual_unit_pallas.1} parent=63 // pred_region
          %p1081 = scmp.lt.s32.totalorder %s22, 1
          %s1082 = scalar_select %p1081, %s22, 1
          %s1083 = smul.addr %s1082, 3
          %s1084 = smul.addr %s1083, 8
          %s1085 = scalar_lea.vmem %s6, %s1084
        $region68: #{residual_unit_pallas.1} parent=63 // pred_fallthru
          _
        // Predicated region
        $region69: #{residual_unit_pallas.1} parent=63 // pred_check
          %p1086 = pneg %p202
        $region70: #{residual_unit_pallas.1} parent=63 // pred_check_branch
          %1088 = sbr.rel (%p1086) target = $region72
        $region71: #{residual_unit_pallas.1} parent=63 // pred_region
          %p1089 = scmp.lt.s32.totalorder %s22, 1
          %s1090 = scalar_select %p1089, %s22, 1
          %s1091 = smul.addr %s1090, 3
          %s1092 = smul.addr %s1091, 8
          %s1093 = scalar_lea.vmem %s7, %s1092
        $region72: #{residual_unit_pallas.1} parent=63 // pred_fallthru
          _
        // Predicated region
        $region73: #{residual_unit_pallas.1} parent=63 // pred_check
          %p1094 = pneg %p228
        $region74: #{residual_unit_pallas.1} parent=63 // pred_check_branch
          %1096 = sbr.rel (%p1094) target = $region76
        $region75: #{residual_unit_pallas.1} parent=63 // pred_region
          %p1097 = scmp.lt.s32.totalorder %s22, 1
          %s1098 = scalar_select %p1097, %s22, 1
          %s1099 = smul.addr %s1098, 3
          %s1100 = smul.addr %s1099, 8
          %s1101 = scalar_lea.vmem %s8, %s1100
        $region76: #{residual_unit_pallas.1} parent=63 // pred_fallthru
          _
      $region64: #{residual_unit_pallas.1} parent=5 // pred_fallthru
        _
    $region6: #{residual_unit_pallas.1} parent=1 // loop_footer
      %s20 = sadd.s32 1, %s16
    $region7: #{residual_unit_pallas.1} parent=1 // loop_footer_branch
      %15 = sbr.rel target = $region3
    $region8: #{residual_unit_pallas.1} parent=1 // loop_exit
      _
    %1102 = vsyncpa [#allocation4], 1
    %s1103 = scalar_lea.sflag [#allocation4], 1
    %1104 = vsyncpa %s1103, 1

</llo_original>
